<compile_context>
chip_gen: v7x
topology: tpu7x:2x2x1
jax: 0.10.0
libtpu: 0.0.40
codegen_flags: <defaults>
</compile_context>

<pallas_src>
import jax
import jax.numpy as jnp
from jax.experimental import pallas as pl
from jax.experimental.pallas import tpu as pltpu

_COLS = 1024            # lane-dense last dim (multiple of 128)
_TILE_ROWS_MAX = 1024   # (1024, 1024) f32 tile = 4 MiB per buffer


def _cline_kernel(scale_ref, x_ref, o_ref):
    # scale_ref: SMEM (1,) float32 holding 2.0 / l
    # x_ref / o_ref: VMEM tiles of shape (tile_rows, _COLS)
    o_ref[...] = (x_ref[...] * scale_ref[0]).astype(o_ref.dtype)


def cline_forward(x: jax.Array, l) -> jax.Array:
    """Computes 2.0 * x / l, matching Cline.forward semantics."""
    orig_shape = x.shape
    orig_dtype = x.dtype
    n = x.size

    # Precompute the scalar scale once (2.0 / l) -> single multiply in kernel.
    scale = (jnp.float32(2.0) / jnp.asarray(l, dtype=jnp.float32)).reshape((1,))

    # Flatten to a lane-dense 2D view, padding the tail if needed.
    flat = x.reshape(-1)
    pad = (-n) % _COLS
    if pad:
        flat = jnp.pad(flat, (0, pad))
    rows = flat.size // _COLS
    x2d = flat.reshape(rows, _COLS)

    # Pick the largest tile that fits comfortably in VMEM (double-buffered).
    if rows <= _TILE_ROWS_MAX:
        tile_rows = rows                      # equals full dim -> always legal
    else:
        tile_rows = _TILE_ROWS_MAX            # multiple of 8
    grid_rows = pl.cdiv(rows, tile_rows)

    out2d = pl.pallas_call(
        _cline_kernel,
        out_shape=jax.ShapeDtypeStruct((rows, _COLS), orig_dtype),
        grid=(grid_rows,),
        in_specs=[
            pl.BlockSpec(memory_space=pltpu.MemorySpace.SMEM),     # scale (1,)
            pl.BlockSpec((tile_rows, _COLS), lambda i: (i, 0)),    # x tile
        ],
        out_specs=pl.BlockSpec((tile_rows, _COLS), lambda i: (i, 0)),
        compiler_params=pltpu.CompilerParams(
            dimension_semantics=("parallel",),
            vmem_limit_bytes=32 * 1024 * 1024,
        ),
        cost_estimate=pl.CostEstimate(
            flops=n,
            transcendentals=0,
            bytes_accessed=2 * n * jnp.dtype(orig_dtype).itemsize,
        ),
    )(scale, x2d)

    out_flat = out2d.reshape(-1)
    if pad:
        out_flat = out_flat[:n]
    return out_flat.reshape(orig_shape)


if __name__ == "__main__":
    key = jax.random.PRNGKey(0)
    # Small NCHW input consistent with the module's conv-style usage.
    x = jax.random.normal(key, (2, 4, 16, 16), dtype=jnp.float32)

    # Deterministic "buffer" value for l (as the module's __init__ would store).
    l_value = 3.5

    out = cline_forward(x, l_value)
    out = jax.block_until_ready(out)

    # Correctness check against the plain-JAX reference of the PyTorch forward.
    ref = 2.0 * x / jnp.float32(l_value)
    assert out.shape == x.shape and out.dtype == x.dtype
    assert jnp.allclose(out, ref, rtol=1e-6, atol=1e-6)

    print("KERNEL_OK")
</pallas_src>

<mosaic_0001>
module attributes {stable_mosaic.version = 11 : i64} {
  func.func @_cline_kernel(%arg0: i32, %arg1: memref<1xf32, #tpu.memory_space<smem>>, %arg2: memref<2x1024xf32, #tpu.memory_space<vmem>>, %arg3: memref<2x1024xf32, #tpu.memory_space<vmem>>) attributes {dimension_semantics = [#tpu.dimension_semantics<parallel>], iteration_bounds = array<i64: 1>, scalar_prefetch = 0 : i64, scratch_operands = 0 : i64, tpu.core_type = #tpu.core_type<tc>, window_params = [{transform_indices = @transform_0, window_bounds = array<i64: 1>}, {transform_indices = @transform_1, window_bounds = array<i64: 2, 1024>}, {transform_indices = @transform_2, window_bounds = array<i64: 2, 1024>}]} {
    %c0 = arith.constant 0 : index
    %c0_0 = arith.constant 0 : index
    %0 = vector.load %arg2[%c0, %c0_0] : memref<2x1024xf32, #tpu.memory_space<vmem>>, vector<2x1024xf32>
    %c0_1 = arith.constant 0 : index
    %1 = memref.load %arg1[%c0_1] : memref<1xf32, #tpu.memory_space<smem>>
    %2 = vector.broadcast %1 : f32 to vector<2x1024xf32>
    %3 = arith.mulf %0, %2 : vector<2x1024xf32>
    %c0_2 = arith.constant 0 : index
    %c0_3 = arith.constant 0 : index
    %4 = vector.load %arg3[%c0_2, %c0_3] : memref<2x1024xf32, #tpu.memory_space<vmem>>, vector<2x1024xf32>
    tpu.vector_store %arg3[%c0_2, %c0_3], %3 {strides = array<i32>} : memref<2x1024xf32, #tpu.memory_space<vmem>>, vector<2x1024xf32>,
    return
  }
  func.func @transform_0(%arg0: i32) -> i32 {
    %c0_i32 = arith.constant 0 : i32
    %c0_i32_0 = arith.constant 0 : i32
    return %c0_i32 : i32
  }
  func.func @transform_1(%arg0: i32) -> (i32, i32) {
    %c0_i32 = arith.constant 0 : i32
    %c0_i32_0 = arith.constant 0 : i32
    return %arg0, %c0_i32 : i32, i32
  }
  func.func @transform_2(%arg0: i32) -> (i32, i32) {
    %c0_i32 = arith.constant 0 : i32
    %c0_i32_0 = arith.constant 0 : i32
    return %arg0, %c0_i32 : i32, i32
  }
}

</mosaic_0001>

<llo_original>
// kernel: tpu_custom_call.1
$region0: #{tpu_custom_call.1}
  #allocation0 [shape = 'u32[]', space=smem, size = 0x4, offset = 0x4, fixed_abs, tag = 'smem constant byte address 0x4 - core index']
  #allocation1 [shape = 'u32[144,128]{1,0:T(1,128)}', space=vmem, size = 0x12000, scoped, tag = 'internal scratch']
  #allocation2 [shape = 'f32[1]{0:T(128)S(6)}', space=smem, size = 0x200, scoped, tag = 'scoped memory for tpu_custom_call.1']
  %s0 = inlined_call_operand.<no memory space> [shape: f32[1], index: 0, kind: input, shape index: {}]
  %s1 = inlined_call_operand.hbm [shape: f32[2,1024], index: 1, kind: input, shape index: {}]
  %s2 = inlined_call_operand.hbm [shape: f32[2,1024], index: 2, kind: output, shape index: {}]
  %s3 = sld [smem:[#allocation0]]
  $region22: #{tpu_custom_call.1} parent=0
    _
  %s5 = ssub.s32 1, %s3
  %s6 = scalar_select 0, %s5, %s3
  %7 = sst [smem:[#allocation2]] %s0
  $region1: #{tpu_custom_call.1} parent=0
    #allocation3 [shape = 'u8[8192]{0}', space=vmem, size = 0x2000, scoped, tag = 'input window, operand 1, single buffered']
    #allocation4 [shape = 's32[1]{0}', space=sflag, size = 0x4, scoped, tag = 'scoped memory for tpu_custom_call.1']
    #allocation5 [shape = 's32[1]{0}', space=sflag, size = 0x4, scoped, tag = 'scoped memory for tpu_custom_call.1']
    #allocation6 [shape = 'u8[8192]{0}', space=vmem, size = 0x2000, scoped, tag = 'output window, operand 0, single buffered']
    %8 = vsyncpa [#allocation4], 0
    %9 = vsyncpa [#allocation5], 0
    // Predicated region
    $region2: #{tpu_custom_call.1} parent=1 // pred_check
      _
    $region3: #{tpu_custom_call.1} parent=1 // pred_check_branch
      %11 = sbr.rel (0) target = $region5
    $region4: #{tpu_custom_call.1} parent=1 // pred_region
      _
    $region5: #{tpu_custom_call.1} parent=1 // pred_fallthru
      _
    // Predicated region
    $region6: #{tpu_custom_call.1} parent=1 // pred_check
      _
    $region7: #{tpu_custom_call.1} parent=1 // pred_check_branch
      %13 = sbr.rel (0) target = $region9
    $region8: #{tpu_custom_call.1} parent=1 // pred_region
      %s15 = ssub.s32 256, 256
      %16 = vsyncadd [#allocation4], %s15
      %s18 = sshll.u32 [#allocation3], 4
      %s19 = int_to_ptr.vmem [resolvable:$true] %s18
      %21 = dma.hbm_to_vmem [thread:$0]  %s1, 256, %s19, [#allocation4]
    $region9: #{tpu_custom_call.1} parent=1 // pred_fallthru
      _
    // Predicated region
    $region10: #{tpu_custom_call.1} parent=1 // pred_check
      _
    $region11: #{tpu_custom_call.1} parent=1 // pred_check_branch
      %23 = sbr.rel (0) target = $region13
    $region12: #{tpu_custom_call.1} parent=1 // pred_region
      %24 = dma.done [#allocation4], 256
    $region13: #{tpu_custom_call.1} parent=1 // pred_fallthru
      _
    %v25 = vld [vmem:[#allocation3] sm:$0xff]
    %v26 = vld [vmem:[#allocation3 + $0x8] sm:$0xff]
    %s27 = sld [smem:[#allocation2]]
    %v28 = vstv %s27
    %v29 = vmul.f32 %v25, %v28
    %v30 = vmul.f32 %v26, %v28
    %31 = vst [vmem:[#allocation6] sm:$0xff] %v29
    %32 = vst [vmem:[#allocation6 + $0x8] sm:$0xff] %v30
    // Predicated region
    $region14: #{tpu_custom_call.1} parent=1 // pred_check
      _
    $region15: #{tpu_custom_call.1} parent=1 // pred_check_branch
      %34 = sbr.rel (0) target = $region17
    $region16: #{tpu_custom_call.1} parent=1 // pred_region
      %s36 = ssub.s32 256, 256
      %37 = vsyncadd [#allocation5], %s36
      %s39 = sshll.u32 [#allocation6], 4
      %s40 = int_to_ptr.vmem [resolvable:$true] %s39
      %42 = dma.vmem_to_hbm [thread:$0]  %s40, 256, %s2, [#allocation5]
    $region17: #{tpu_custom_call.1} parent=1 // pred_fallthru
      _
    // Predicated region
    $region18: #{tpu_custom_call.1} parent=1 // pred_check
      _
    $region19: #{tpu_custom_call.1} parent=1 // pred_check_branch
      %44 = sbr.rel (0) target = $region21
    $region20: #{tpu_custom_call.1} parent=1 // pred_region
      %45 = dma.done [#allocation5], 256
    $region21: #{tpu_custom_call.1} parent=1 // pred_fallthru
      _
    %46 = vsyncpa [#allocation4], 1
    %47 = vsyncpa [#allocation5], 1

</llo_original>
